<compile_context>
chip_gen: v5e
topology: v5e:2x2
jax: 0.10.0
libtpu: 0.0.40
codegen_flags: <defaults>
</compile_context>

<pallas_src>
import jax
import jax.numpy as jnp
from jax.experimental import pallas as pl
from jax.experimental.pallas import tpu as pltpu

IN_FEATURES = 16 * 16   # 256
HIDDEN = 128
OUT_FEATURES = 10
OUT_PAD = 128           # lane-dense padded output width (multiple of 128)
SUBLANE = 8             # f32 sublane quantum
MAX_TB = 512            # max rows per batch tile (fits VMEM with huge margin)


def _round_up(n, m):
    return ((n + m - 1) // m) * m


def mlp_kernel(x_ref, w1_ref, b1_ref, w2_ref, b2_ref, o_ref):
    # x_ref: (TB, 256) f32      w1_ref: (256, 128) bf16   b1_ref: (1, 128) f32
    # w2_ref: (128, 128) bf16 [cols >= 10 zero]            b2_ref: (1, 128) f32
    # o_ref: (TB, 128) f32 lane-dense output slab
    x = x_ref[...].astype(jnp.bfloat16)
    h = jnp.dot(x, w1_ref[...], preferred_element_type=jnp.float32) + b1_ref[...]
    h = jnp.maximum(h, 0.0)                                   # ReLU
    out = jnp.dot(h.astype(jnp.bfloat16), w2_ref[...],
                  preferred_element_type=jnp.float32) + b2_ref[...]
    o_ref[...] = out.astype(o_ref.dtype)


def prepare_params(w1, b1, w2, b2):
    """One-time conversion from PyTorch layout to kernel layout.

    w1: (128, 256), b1: (128,), w2: (10, 128), b2: (10,)
      -> w1_t: (256, 128) bf16, b1_r: (1, 128) f32,
         w2_p: (128, 128) bf16 (cols >= 10 zero), b2_p: (1, 128) f32 (lanes >= 10 zero)
    """
    w1_t = jnp.asarray(w1.T, jnp.bfloat16)                                   # (256, 128)
    b1_r = jnp.asarray(b1, jnp.float32).reshape(1, HIDDEN)                   # (1, 128)
    w2_p = jnp.zeros((HIDDEN, OUT_PAD), jnp.bfloat16).at[:, :OUT_FEATURES].set(
        jnp.asarray(w2.T, jnp.bfloat16))                                     # (128, 128)
    b2_p = jnp.zeros((1, OUT_PAD), jnp.float32).at[0, :OUT_FEATURES].set(
        jnp.asarray(b2, jnp.float32))                                        # (1, 128)
    return w1_t, b1_r, w2_p, b2_p


def simple_net_forward(x, w1_t, b1_r, w2_p, b2_p):
    """x: (B, 1, 16, 16) NCHW float32. Params already in kernel layout.
    Returns (B, 10)."""
    B = x.shape[0]
    x_flat = x.reshape(B, -1)                                    # nn.Flatten()

    # Batch tile size: up to MAX_TB rows per grid step, multiple of the 8-row
    # sublane quantum. The ragged last block is masked by Pallas -- no jnp.pad.
    TB = min(MAX_TB, _round_up(B, SUBLANE))
    grid = (pl.cdiv(B, TB),)

    out_padded = pl.pallas_call(
        mlp_kernel,
        out_shape=jax.ShapeDtypeStruct((B, OUT_PAD), jnp.float32),
        grid=grid,
        in_specs=[
            pl.BlockSpec((TB, IN_FEATURES), lambda i: (i, 0)),
            # Fixed block index for all batch tiles -> weights DMA'd once per
            # call and stay VMEM-resident across grid steps.
            pl.BlockSpec((IN_FEATURES, HIDDEN), lambda i: (0, 0)),
            pl.BlockSpec((1, HIDDEN), lambda i: (0, 0)),
            pl.BlockSpec((HIDDEN, OUT_PAD), lambda i: (0, 0)),
            pl.BlockSpec((1, OUT_PAD), lambda i: (0, 0)),
        ],
        out_specs=pl.BlockSpec((TB, OUT_PAD), lambda i: (i, 0)),
        compiler_params=pltpu.CompilerParams(
            dimension_semantics=("parallel",)),   # 2nd TC on v7x; no-op v5e/v6e
    )(x_flat, w1_t, b1_r, w2_p, b2_p)

    # Slice the 10 real output lanes. (A consumer that can take the padded
    # (B, 128) slab should use it directly and fuse the slice downstream.)
    return out_padded[:, :OUT_FEATURES]


def init_params(key):
    # Matches nn.Linear(256, 128) and nn.Linear(128, 10) shapes
    # (PyTorch stores weight as (out_features, in_features)).
    k1, k2, k3, k4 = jax.random.split(key, 4)
    w1 = jax.random.normal(k1, (HIDDEN, IN_FEATURES), jnp.float32) * 0.05
    b1 = jax.random.normal(k2, (HIDDEN,), jnp.float32) * 0.05
    w2 = jax.random.normal(k3, (OUT_FEATURES, HIDDEN), jnp.float32) * 0.05
    b2 = jax.random.normal(k4, (OUT_FEATURES,), jnp.float32) * 0.05
    return w1, b1, w2, b2


if __name__ == "__main__":
    key = jax.random.PRNGKey(0)
    kx, kp = jax.random.split(key)
    x = jax.random.normal(kx, (2, 1, 16, 16), jnp.float32)  # NCHW, flattens to 256
    w1, b1, w2, b2 = init_params(kp)

    # One-time layout prep (transpose / pad / bf16 cast) -- NOT the per-call path.
    w1_t, b1_r, w2_p, b2_p = prepare_params(w1, b1, w2, b2)

    out = simple_net_forward(x, w1_t, b1_r, w2_p, b2_p)
    jax.block_until_ready(out)

    # Pure-JAX reference check against the original (PyTorch-layout, f32) params.
    # Tolerance relaxed because weights run through the MXU in bf16.
    x_flat = x.reshape(2, -1)
    ref = jnp.maximum(x_flat @ w1.T + b1, 0.0) @ w2.T + b2
    assert out.shape == (2, 10)
    assert jnp.allclose(out, ref, atol=2e-2, rtol=2e-2), "mismatch vs reference"
    print("KERNEL_OK")
</pallas_src>

<mosaic_0001>
module attributes {stable_mosaic.version = 11 : i64} {
  func.func @mlp_kernel(%arg0: i32, %arg1: memref<8x256xf32, #tpu.memory_space<vmem>>, %arg2: memref<256x128xbf16, #tpu.memory_space<vmem>>, %arg3: memref<1x128xf32, #tpu.memory_space<vmem>>, %arg4: memref<128x128xbf16, #tpu.memory_space<vmem>>, %arg5: memref<1x128xf32, #tpu.memory_space<vmem>>, %arg6: memref<8x128xf32, #tpu.memory_space<vmem>>) attributes {dimension_semantics = [#tpu.dimension_semantics<parallel>], iteration_bounds = array<i64: 1>, scalar_prefetch = 0 : i64, scratch_operands = 0 : i64, tpu.core_type = #tpu.core_type<tc>, window_params = [{transform_indices = @transform_0, window_bounds = array<i64: 8, 256>}, {pipeline_mode = #tpu.pipeline_mode<synchronous>, transform_indices = @transform_1, window_bounds = array<i64: 256, 128>}, {pipeline_mode = #tpu.pipeline_mode<synchronous>, transform_indices = @transform_2, window_bounds = array<i64: 1, 128>}, {pipeline_mode = #tpu.pipeline_mode<synchronous>, transform_indices = @transform_3, window_bounds = array<i64: 128, 128>}, {pipeline_mode = #tpu.pipeline_mode<synchronous>, transform_indices = @transform_4, window_bounds = array<i64: 1, 128>}, {transform_indices = @transform_5, window_bounds = array<i64: 8, 128>}]} {
    %c0 = arith.constant 0 : index
    %c0_0 = arith.constant 0 : index
    %0 = vector.load %arg1[%c0, %c0_0] : memref<8x256xf32, #tpu.memory_space<vmem>>, vector<8x256xf32>
    %1 = arith.truncf %0 : vector<8x256xf32> to vector<8x256xbf16>
    %c0_1 = arith.constant 0 : index
    %c0_2 = arith.constant 0 : index
    %2 = vector.load %arg2[%c0_1, %c0_2] : memref<256x128xbf16, #tpu.memory_space<vmem>>, vector<256x128xbf16>
    %cst = arith.constant dense<0.000000e+00> : vector<8x128xf32>
    %3 = tpu.matmul %1, %2, %cst {dimension_numbers = #tpu.dot_dimension_numbers<[1], [0], [0], [1], [0, 0, 1, 1], [], []>} : vector<8x256xbf16>, vector<256x128xbf16>, vector<8x128xf32> -> vector<8x128xf32>
    %c0_3 = arith.constant 0 : index
    %c0_4 = arith.constant 0 : index
    %4 = vector.load %arg3[%c0_3, %c0_4] : memref<1x128xf32, #tpu.memory_space<vmem>>, vector<1x128xf32>
    %5 = vector.broadcast %4 : vector<1x128xf32> to vector<8x128xf32>
    %6 = arith.addf %3, %5 : vector<8x128xf32>
    %cst_5 = arith.constant 0.000000e+00 : f32
    %7 = vector.broadcast %cst_5 : f32 to vector<8x128xf32>
    %8 = arith.maximumf %6, %7 : vector<8x128xf32>
    %9 = arith.truncf %8 : vector<8x128xf32> to vector<8x128xbf16>
    %c0_6 = arith.constant 0 : index
    %c0_7 = arith.constant 0 : index
    %10 = vector.load %arg4[%c0_6, %c0_7] : memref<128x128xbf16, #tpu.memory_space<vmem>>, vector<128x128xbf16>
    %cst_8 = arith.constant dense<0.000000e+00> : vector<8x128xf32>
    %11 = tpu.matmul %9, %10, %cst_8 {dimension_numbers = #tpu.dot_dimension_numbers<[1], [0], [0], [1], [0, 0, 1, 1], [], []>} : vector<8x128xbf16>, vector<128x128xbf16>, vector<8x128xf32> -> vector<8x128xf32>
    %c0_9 = arith.constant 0 : index
    %c0_10 = arith.constant 0 : index
    %12 = vector.load %arg5[%c0_9, %c0_10] : memref<1x128xf32, #tpu.memory_space<vmem>>, vector<1x128xf32>
    %13 = vector.broadcast %12 : vector<1x128xf32> to vector<8x128xf32>
    %14 = arith.addf %11, %13 : vector<8x128xf32>
    %c0_11 = arith.constant 0 : index
    %c0_12 = arith.constant 0 : index
    %15 = vector.load %arg6[%c0_11, %c0_12] : memref<8x128xf32, #tpu.memory_space<vmem>>, vector<8x128xf32>
    tpu.vector_store %arg6[%c0_11, %c0_12], %14 {strides = array<i32>} : memref<8x128xf32, #tpu.memory_space<vmem>>, vector<8x128xf32>,
    return
  }
  func.func @transform_0(%arg0: i32) -> (i32, i32) {
    %c0_i32 = arith.constant 0 : i32
    %c0_i32_0 = arith.constant 0 : i32
    return %arg0, %c0_i32 : i32, i32
  }
  func.func @transform_1(%arg0: i32) -> (i32, i32) {
    %c0_i32 = arith.constant 0 : i32
    %c0_i32_0 = arith.constant 0 : i32
    %c0_i32_1 = arith.constant 0 : i32
    return %c0_i32, %c0_i32_0 : i32, i32
  }
  func.func @transform_2(%arg0: i32) -> (i32, i32) {
    %c0_i32 = arith.constant 0 : i32
    %c0_i32_0 = arith.constant 0 : i32
    %c0_i32_1 = arith.constant 0 : i32
    return %c0_i32, %c0_i32_0 : i32, i32
  }
  func.func @transform_3(%arg0: i32) -> (i32, i32) {
    %c0_i32 = arith.constant 0 : i32
    %c0_i32_0 = arith.constant 0 : i32
    %c0_i32_1 = arith.constant 0 : i32
    return %c0_i32, %c0_i32_0 : i32, i32
  }
  func.func @transform_4(%arg0: i32) -> (i32, i32) {
    %c0_i32 = arith.constant 0 : i32
    %c0_i32_0 = arith.constant 0 : i32
    %c0_i32_1 = arith.constant 0 : i32
    return %c0_i32, %c0_i32_0 : i32, i32
  }
  func.func @transform_5(%arg0: i32) -> (i32, i32) {
    %c0_i32 = arith.constant 0 : i32
    %c0_i32_0 = arith.constant 0 : i32
    return %arg0, %c0_i32 : i32, i32
  }
}

</mosaic_0001>

<llo_original>
// kernel: tpu_custom_call.1
$region0: #{tpu_custom_call.1}
  #allocation0 [shape = 'u32[]', space=smem, size = 0x4, offset = 0x4, fixed_abs, tag = 'smem constant byte address 0x4 - core index']
  #allocation1 [shape = 'u32[72,128]{1,0:T(1,128)}', space=vmem, size = 0x9000, scoped, tag = 'internal scratch']
  %s0 = inlined_call_operand.hbm [shape: f32[2,256], index: 0, kind: input, shape index: {}]
  %s1 = inlined_call_operand.hbm [shape: bf16[256,128], index: 1, kind: input, shape index: {}]
  %s2 = inlined_call_operand.vmem [shape: f32[1,128], index: 2, kind: input, shape index: {}]
  %s3 = inlined_call_operand.hbm [shape: bf16[128,128], index: 3, kind: input, shape index: {}]
  %s4 = inlined_call_operand.vmem [shape: f32[1,128], index: 4, kind: input, shape index: {}]
  %s5 = inlined_call_operand.hbm [shape: f32[2,128], index: 5, kind: output, shape index: {}]
  %s6 = sld [smem:[#allocation0]]
  $region42: #{tpu_custom_call.1} parent=0
    _
  %s8 = ssub.s32 1, %s6
  %s9 = scalar_select 0, %s8, %s6
  $region1: #{tpu_custom_call.1} parent=0
    #allocation2 [shape = 'u8[8192]{0}', space=vmem, size = 0x2000, scoped, tag = 'input window, operand 0, single buffered']
    #allocation3 [shape = 's32[1]{0}', space=sflag, size = 0x4, scoped, tag = 'scoped memory for tpu_custom_call.1']
    #allocation4 [shape = 's32[1]{0}', space=sflag, size = 0x4, scoped, tag = 'scoped memory for tpu_custom_call.1']
    #allocation5 [shape = 'u8[65536]{0}', space=vmem, size = 0x10000, scoped, tag = 'input window, operand 1, single buffered']
    #allocation6 [shape = 's32[1]{0}', space=sflag, size = 0x4, scoped, tag = 'scoped memory for tpu_custom_call.1']
    #allocation7 [shape = 'u8[32768]{0}', space=vmem, size = 0x8000, scoped, tag = 'input window, operand 3, single buffered']
    #allocation8 [shape = 'u8[4096]{0}', space=vmem, size = 0x1000, scoped, tag = 'output window, operand 0, single buffered']
    %10 = vsyncpa [#allocation3], 0
    %11 = vsyncpa [#allocation6], 0
    %12 = vsyncpa [#allocation4], 0
    // Predicated region
    $region2: #{tpu_custom_call.1} parent=1 // pred_check
      _
    $region3: #{tpu_custom_call.1} parent=1 // pred_check_branch
      %14 = sbr.rel (0) target = $region5
    $region4: #{tpu_custom_call.1} parent=1 // pred_region
      %16 = vsyncadd [#allocation3], 192
      %s17 = sshll.u32 %s0, 4
      %s18 = int_to_ptr.hbm [resolvable:$true] %s17
      %s19 = sshll.u32 [#allocation2], 4
      %s20 = int_to_ptr.vmem [resolvable:$true] %s19
      %25 = dma.hbm_to_vmem [thread:$0]  %s18, 64, %s20, [#allocation3], 64, 64, 4
    $region5: #{tpu_custom_call.1} parent=1 // pred_fallthru
      _
    // Predicated region
    $region6: #{tpu_custom_call.1} parent=1 // pred_check
      _
    $region7: #{tpu_custom_call.1} parent=1 // pred_check_branch
      %27 = sbr.rel (0) target = $region9
    $region8: #{tpu_custom_call.1} parent=1 // pred_region
      %29 = vsyncadd [#allocation6], 0
      %s30 = sshll.u32 %s1, 4
      %s31 = int_to_ptr.hbm [resolvable:$true] %s30
      %s32 = sshll.u32 [#allocation5], 4
      %s33 = int_to_ptr.vmem [resolvable:$true] %s32
      %38 = dma.hbm_to_vmem [thread:$0]  %s31, 2048, %s33, [#allocation6], 64, 64, 4
    $region9: #{tpu_custom_call.1} parent=1 // pred_fallthru
      _
    // Predicated region
    $region10: #{tpu_custom_call.1} parent=1 // pred_check
      _
    $region11: #{tpu_custom_call.1} parent=1 // pred_check_branch
      %40 = sbr.rel (0) target = $region13
    $region12: #{tpu_custom_call.1} parent=1 // pred_region
      _
    $region13: #{tpu_custom_call.1} parent=1 // pred_fallthru
      _
    // Predicated region
    $region14: #{tpu_custom_call.1} parent=1 // pred_check
      _
    $region15: #{tpu_custom_call.1} parent=1 // pred_check_branch
      %42 = sbr.rel (0) target = $region17
    $region16: #{tpu_custom_call.1} parent=1 // pred_region
      %44 = vsyncadd [#allocation6], 0
      %s45 = sshll.u32 %s3, 4
      %s46 = int_to_ptr.hbm [resolvable:$true] %s45
      %s47 = sshll.u32 [#allocation7], 4
      %s48 = int_to_ptr.vmem [resolvable:$true] %s47
      %53 = dma.hbm_to_vmem [thread:$0]  %s46, 1024, %s48, [#allocation6], 64, 64, 4
    $region17: #{tpu_custom_call.1} parent=1 // pred_fallthru
      _
    // Predicated region
    $region18: #{tpu_custom_call.1} parent=1 // pred_check
      _
    $region19: #{tpu_custom_call.1} parent=1 // pred_check_branch
      %55 = sbr.rel (0) target = $region21
    $region20: #{tpu_custom_call.1} parent=1 // pred_region
      _
    $region21: #{tpu_custom_call.1} parent=1 // pred_fallthru
      _
    // Predicated region
    $region22: #{tpu_custom_call.1} parent=1 // pred_check
      _
    $region23: #{tpu_custom_call.1} parent=1 // pred_check_branch
      %57 = sbr.rel (0) target = $region25
    $region24: #{tpu_custom_call.1} parent=1 // pred_region
      %59 = dma.done [#allocation3], 256
    $region25: #{tpu_custom_call.1} parent=1 // pred_fallthru
      _
    // Predicated region
    $region26: #{tpu_custom_call.1} parent=1 // pred_check
      _
    $region27: #{tpu_custom_call.1} parent=1 // pred_check_branch
      %61 = sbr.rel (0) target = $region29
    $region28: #{tpu_custom_call.1} parent=1 // pred_region
      %63 = dma.done [#allocation6], 2048
    $region29: #{tpu_custom_call.1} parent=1 // pred_fallthru
      _
    // Predicated region
    $region30: #{tpu_custom_call.1} parent=1 // pred_check
      _
    $region31: #{tpu_custom_call.1} parent=1 // pred_check_branch
      %65 = sbr.rel (0) target = $region33
    $region32: #{tpu_custom_call.1} parent=1 // pred_region
      %67 = dma.done [#allocation6], 1024
    $region33: #{tpu_custom_call.1} parent=1 // pred_fallthru
      _
    %v68 = vld [vmem:[#allocation2] sm:$0xf]
    %v69 = vld [vmem:[#allocation2 + $0x4] sm:$0xf]
    %v70 = vld [vmem:[#allocation2 + $0x8] sm:$0xf]
    %v71 = vld [vmem:[#allocation2 + $0xc] sm:$0xf]
    %76 = vst [vmem:[#allocation1] ss:$4 sm:$0xff] %v68
    %s77 = scalar_lea.vmem [#allocation1], 1
    %78 = vst [vmem:[%s77] ss:$4 sm:$0xff] %v69
    %s79 = scalar_lea.vmem [#allocation1], 2
    %80 = vst [vmem:[%s79] ss:$4 sm:$0xff] %v70
    %s81 = scalar_lea.vmem [#allocation1], 3
    %82 = vst [vmem:[%s81] ss:$4 sm:$0xff] %v71
    %v83 = vld.sshfl [vmem:[#allocation1] sm:$0xff pattern:$0x73625140]
    %v84 = vld.sshfl [vmem:[#allocation1 + $0x8] sm:$0xff pattern:$0x73625140]
    %v87 = vpack.c.bf16 %v83, %v83
    %v88 = vpack.c.bf16 %v84, %v84
    %v89 = vld [vmem:[#allocation5] sm:$0xf]
    %v90 = vld [vmem:[#allocation5 + $0x4] sm:$0xf]
    %v91 = vld [vmem:[#allocation5 + $0x8] sm:$0xf]
    %v92 = vld [vmem:[#allocation5 + $0xc] sm:$0xf]
    %v93 = vld [vmem:[#allocation5 + $0x10] sm:$0xf]
    %v94 = vld [vmem:[#allocation5 + $0x14] sm:$0xf]
    %v95 = vld [vmem:[#allocation5 + $0x18] sm:$0xf]
    %v96 = vld [vmem:[#allocation5 + $0x1c] sm:$0xf]
    %v97 = vld [vmem:[#allocation5 + $0x20] sm:$0xf]
    %v98 = vld [vmem:[#allocation5 + $0x24] sm:$0xf]
    %v99 = vld [vmem:[#allocation5 + $0x28] sm:$0xf]
    %v100 = vld [vmem:[#allocation5 + $0x2c] sm:$0xf]
    %v101 = vld [vmem:[#allocation5 + $0x30] sm:$0xf]
    %v102 = vld [vmem:[#allocation5 + $0x34] sm:$0xf]
    %v103 = vld [vmem:[#allocation5 + $0x38] sm:$0xf]
    %v104 = vld [vmem:[#allocation5 + $0x3c] sm:$0xf]
    %v105 = vld [vmem:[#allocation5 + $0x40] sm:$0xf]
    %v106 = vld [vmem:[#allocation5 + $0x44] sm:$0xf]
    %v107 = vld [vmem:[#allocation5 + $0x48] sm:$0xf]
    %v108 = vld [vmem:[#allocation5 + $0x4c] sm:$0xf]
    %v109 = vld [vmem:[#allocation5 + $0x50] sm:$0xf]
    %v110 = vld [vmem:[#allocation5 + $0x54] sm:$0xf]
    %v111 = vld [vmem:[#allocation5 + $0x58] sm:$0xf]
    %v112 = vld [vmem:[#allocation5 + $0x5c] sm:$0xf]
    %v113 = vld [vmem:[#allocation5 + $0x60] sm:$0xf]
    %v114 = vld [vmem:[#allocation5 + $0x64] sm:$0xf]
    %v115 = vld [vmem:[#allocation5 + $0x68] sm:$0xf]
    %v116 = vld [vmem:[#allocation5 + $0x6c] sm:$0xf]
    %v117 = vld [vmem:[#allocation5 + $0x70] sm:$0xf]
    %v118 = vld [vmem:[#allocation5 + $0x74] sm:$0xf]
    %v119 = vld [vmem:[#allocation5 + $0x78] sm:$0xf]
    %v120 = vld [vmem:[#allocation5 + $0x7c] sm:$0xf]
    %v121 = vld [vmem:[%s2] sm:$0x1]
    %v123 = vperm.slane %v121, 0
    %v157 = vunpack.c.l.b16 %v89
    %v158 = vunpack.c.l.b16 %v90
    %v159 = vunpack.c.l.b16 %v91
    %v160 = vunpack.c.l.b16 %v92
    %v161 = vunpack.c.l.b16 %v93
    %v162 = vunpack.c.l.b16 %v94
    %v163 = vunpack.c.l.b16 %v95
    %v164 = vunpack.c.l.b16 %v96
    %v165 = vunpack.c.l.b16 %v97
    %v166 = vunpack.c.l.b16 %v98
    %v167 = vunpack.c.l.b16 %v99
    %v168 = vunpack.c.l.b16 %v100
    %v169 = vunpack.c.l.b16 %v101
    %v170 = vunpack.c.l.b16 %v102
    %v171 = vunpack.c.l.b16 %v103
    %v172 = vunpack.c.l.b16 %v104
    %v173 = vunpack.c.l.b16 %v105
    %v174 = vunpack.c.l.b16 %v106
    %v175 = vunpack.c.l.b16 %v107
    %v176 = vunpack.c.l.b16 %v108
    %v177 = vunpack.c.l.b16 %v109
    %v178 = vunpack.c.l.b16 %v110
    %v179 = vunpack.c.l.b16 %v111
    %v180 = vunpack.c.l.b16 %v112
    %v181 = vunpack.c.l.b16 %v113
    %v182 = vunpack.c.l.b16 %v114
    %v183 = vunpack.c.l.b16 %v115
    %v184 = vunpack.c.l.b16 %v116
    %v185 = vunpack.c.l.b16 %v117
    %v186 = vunpack.c.l.b16 %v118
    %v187 = vunpack.c.l.b16 %v119
    %v188 = vunpack.c.l.b16 %v120
    %v189 = vpack.c.b16 %v158, %v157
    %v190 = vpack.c.b16 %v160, %v159
    %v191 = vpack.c.b16 %v162, %v161
    %v192 = vpack.c.b16 %v164, %v163
    %v193 = vpack.c.b16 %v166, %v165
    %v194 = vpack.c.b16 %v168, %v167
    %v195 = vpack.c.b16 %v170, %v169
    %v196 = vpack.c.b16 %v172, %v171
    %v197 = vpack.c.b16 %v174, %v173
    %v198 = vpack.c.b16 %v176, %v175
    %v199 = vpack.c.b16 %v178, %v177
    %v200 = vpack.c.b16 %v180, %v179
    %v201 = vpack.c.b16 %v182, %v181
    %v202 = vpack.c.b16 %v184, %v183
    %v203 = vpack.c.b16 %v186, %v185
    %v204 = vpack.c.b16 %v188, %v187
    %221 = vmatpush.bf16.msra.mxu0 %v196
    %222 = vmatpush.bf16.msra.mxu0 %v195
    %223 = vmatpush.bf16.msra.mxu0 %v194
    %224 = vmatpush.bf16.msra.mxu0 %v193
    %225 = vmatpush.bf16.msra.mxu0 %v192
    %226 = vmatpush.bf16.msra.mxu0 %v191
    %227 = vmatpush.bf16.msra.mxu0 %v190
    %228 = vmatpush.bf16.msra.mxu0 %v189
    %229 = vmatmul.bf16.gmra.mxu0 %v87
    %v230 = vpop.f32.mrf.mxu0
    %v231 = vadd.f32 %v123, %v230
    %v232 = vpop.f32.mrf.mxu0
    %233 = vdwg.mxu0
    %234 = vmatpush.bf16.msra.mxu0 %v204
    %235 = vmatpush.bf16.msra.mxu0 %v203
    %236 = vmatpush.bf16.msra.mxu0 %v202
    %237 = vmatpush.bf16.msra.mxu0 %v201
    %238 = vmatpush.bf16.msra.mxu0 %v200
    %239 = vmatpush.bf16.msra.mxu0 %v199
    %240 = vmatpush.bf16.msra.mxu0 %v198
    %241 = vmatpush.bf16.msra.mxu0 %v197
    %242 = vmatmul.bf16.gmra.mxu0 %v88
    %v243 = vpop.f32.mrf.mxu0
    %v244 = vadd.f32 %v231, %v243
    %v245 = vpop.f32.mrf.mxu0
    %246 = vdwg.mxu0
    %v247 = vmax.f32 %v244, 0.0
    %v248 = vpack.c.bf16 %v247, %v247
    %v249 = vld [vmem:[#allocation7] sm:$0xf]
    %v250 = vld [vmem:[#allocation7 + $0x4] sm:$0xf]
    %v251 = vld [vmem:[#allocation7 + $0x8] sm:$0xf]
    %v252 = vld [vmem:[#allocation7 + $0xc] sm:$0xf]
    %v253 = vld [vmem:[#allocation7 + $0x10] sm:$0xf]
    %v254 = vld [vmem:[#allocation7 + $0x14] sm:$0xf]
    %v255 = vld [vmem:[#allocation7 + $0x18] sm:$0xf]
    %v256 = vld [vmem:[#allocation7 + $0x1c] sm:$0xf]
    %v257 = vld [vmem:[#allocation7 + $0x20] sm:$0xf]
    %v258 = vld [vmem:[#allocation7 + $0x24] sm:$0xf]
    %v259 = vld [vmem:[#allocation7 + $0x28] sm:$0xf]
    %v260 = vld [vmem:[#allocation7 + $0x2c] sm:$0xf]
    %v261 = vld [vmem:[#allocation7 + $0x30] sm:$0xf]
    %v262 = vld [vmem:[#allocation7 + $0x34] sm:$0xf]
    %v263 = vld [vmem:[#allocation7 + $0x38] sm:$0xf]
    %v264 = vld [vmem:[#allocation7 + $0x3c] sm:$0xf]
    %v265 = vld [vmem:[%s4] sm:$0x1]
    %v267 = vperm.slane %v265, 0
    %v285 = vunpack.c.l.b16 %v249
    %v286 = vunpack.c.l.b16 %v250
    %v287 = vunpack.c.l.b16 %v251
    %v288 = vunpack.c.l.b16 %v252
    %v289 = vunpack.c.l.b16 %v253
    %v290 = vunpack.c.l.b16 %v254
    %v291 = vunpack.c.l.b16 %v255
    %v292 = vunpack.c.l.b16 %v256
    %v293 = vunpack.c.l.b16 %v257
    %v294 = vunpack.c.l.b16 %v258
    %v295 = vunpack.c.l.b16 %v259
    %v296 = vunpack.c.l.b16 %v260
    %v297 = vunpack.c.l.b16 %v261
    %v298 = vunpack.c.l.b16 %v262
    %v299 = vunpack.c.l.b16 %v263
    %v300 = vunpack.c.l.b16 %v264
    %v301 = vpack.c.b16 %v286, %v285
    %v302 = vpack.c.b16 %v288, %v287
    %v303 = vpack.c.b16 %v290, %v289
    %v304 = vpack.c.b16 %v292, %v291
    %v305 = vpack.c.b16 %v294, %v293
    %v306 = vpack.c.b16 %v296, %v295
    %v307 = vpack.c.b16 %v298, %v297
    %v308 = vpack.c.b16 %v300, %v299
    %317 = vmatpush.bf16.msra.mxu0 %v308
    %318 = vmatpush.bf16.msra.mxu0 %v307
    %319 = vmatpush.bf16.msra.mxu0 %v306
    %320 = vmatpush.bf16.msra.mxu0 %v305
    %321 = vmatpush.bf16.msra.mxu0 %v304
    %322 = vmatpush.bf16.msra.mxu0 %v303
    %323 = vmatpush.bf16.msra.mxu0 %v302
    %324 = vmatpush.bf16.msra.mxu0 %v301
    %325 = vmatmul.bf16.gmra.mxu0 %v248
    %v326 = vpop.f32.mrf.mxu0
    %v327 = vadd.f32 %v267, %v326
    %v328 = vpop.f32.mrf.mxu0
    %329 = vdwg.mxu0
    %330 = vst [vmem:[#allocation8] sm:$0xff] %v327
    // Predicated region
    $region34: #{tpu_custom_call.1} parent=1 // pred_check
      _
    $region35: #{tpu_custom_call.1} parent=1 // pred_check_branch
      %332 = sbr.rel (0) target = $region37
    $region36: #{tpu_custom_call.1} parent=1 // pred_region
      %334 = vsyncadd [#allocation4], 96
      %s335 = sshll.u32 [#allocation8], 4
      %s336 = int_to_ptr.vmem [resolvable:$true] %s335
      %s337 = sshll.u32 %s5, 4
      %s338 = int_to_ptr.hbm [resolvable:$true] %s337
      %343 = dma.vmem_to_hbm [thread:$0]  %s336, 32, %s338, [#allocation4], 32, 32, 2
    $region37: #{tpu_custom_call.1} parent=1 // pred_fallthru
      _
    // Predicated region
    $region38: #{tpu_custom_call.1} parent=1 // pred_check
      _
    $region39: #{tpu_custom_call.1} parent=1 // pred_check_branch
      %345 = sbr.rel (0) target = $region41
    $region40: #{tpu_custom_call.1} parent=1 // pred_region
      %347 = dma.done [#allocation4], 128
    $region41: #{tpu_custom_call.1} parent=1 // pred_fallthru
      _
    %348 = vsyncpa [#allocation3], 1
    %349 = vsyncpa [#allocation6], 1
    %350 = vsyncpa [#allocation4], 1

</llo_original>
